<compile_context>
chip_gen: v5e
topology: v5e:2x2
jax: 0.10.0
libtpu: 0.0.40
codegen_flags: <defaults>
</compile_context>

<pallas_src>
import functools

import jax
import jax.numpy as jnp
from jax.experimental import pallas as pl
from jax.experimental.pallas import tpu as pltpu


def _round_up(x, m):
    return ((x + m - 1) // m) * m


def _vmem_cap_bytes():
    """Generation-aware VMEM budget (physical capacity minus headroom)."""
    try:
        cap = int(pltpu.get_tpu_info().vmem_capacity_bytes)
    except Exception:
        cap = 64 << 20  # conservative: assume v7x per-TensorCore VMEM
    # leave 8 MiB headroom for the compiler, never ask for more than 100 MiB
    return max(min(cap - (8 << 20), 100 << 20), 16 << 20)


# ---------------------------------------------------------------------------
# Kernel
# ---------------------------------------------------------------------------
def _mlp_kernel(x_ref, w1_ref, b1_ref, w2_ref, b2_ref, o_ref, *, activation):
    # hidden = act(X @ W1 + b1): MXU matmul with f32 accumulation.
    h = jnp.dot(x_ref[...], w1_ref[...], preferred_element_type=jnp.float32)
    h = h + b1_ref[...]  # b1 is (1, H_pad) -> broadcasts over batch rows
    if activation == "Sigmoid":
        h = jax.nn.sigmoid(h)
    elif activation == "Tanh":
        h = jnp.tanh(h)
    else:  # torch module default (activate is None) -> ReLU
        h = jnp.maximum(h, 0.0)
    # TODO(synk): for very wide hidden layers (H_pad >~ 2048), chunk H with a
    # lax.fori_loop over 512-column W1/W2 slices accumulating into an f32
    # scratch instead of materialising the full (TB, H_pad) intermediate.
    h = h.astype(w2_ref.dtype)  # bf16 operands for the 2nd MXU pass
    o = jnp.dot(h, w2_ref[...], preferred_element_type=jnp.float32)
    o_ref[...] = (o + b2_ref[...]).astype(o_ref.dtype)


# ---------------------------------------------------------------------------
# Parameter preparation (hoisted out of the forward pass; run once)
# ---------------------------------------------------------------------------
def prepare_params(w1, b1, w2, b2, compute_dtype=jnp.bfloat16):
    """Pad/cast weights once so every forward call skips that HBM traffic."""
    K, H = w1.shape
    O = w2.shape[1]
    K_pad = _round_up(K, 128)
    H_pad = _round_up(H, 128)
    O_pad = _round_up(O, 128)
    cdt = jnp.dtype(compute_dtype)
    w1_p = jnp.zeros((K_pad, H_pad), cdt).at[:K, :H].set(w1.astype(cdt))
    b1_p = jnp.zeros((1, H_pad), jnp.float32).at[0, :H].set(b1.astype(jnp.float32))
    w2_p = jnp.zeros((H_pad, O_pad), cdt).at[:H, :O].set(w2.astype(cdt))
    b2_p = jnp.zeros((1, O_pad), jnp.float32).at[0, :O].set(b2.astype(jnp.float32))
    return {
        "w1": w1_p, "b1": b1_p, "w2": w2_p, "b2": b2_p,
        "K": K, "K_pad": K_pad, "H": H, "H_pad": H_pad, "O": O, "O_pad": O_pad,
        "compute_dtype": cdt,
    }


# ---------------------------------------------------------------------------
# Forward pass
# ---------------------------------------------------------------------------
_SINGLE_BUFFER_WEIGHTS_OK = None  # cached once; fallback if Buffered(1) rejected


def _build_call(params, activation, TB, grid_m, out_dtype, vmem_limit,
                cost, single_buffer_weights):
    K_pad, H_pad, O_pad = params["K_pad"], params["H_pad"], params["O_pad"]

    def _resident_spec(shape):
        if single_buffer_weights:
            return pl.BlockSpec(shape, lambda i: (0, 0),
                                pipeline_mode=pl.Buffered(1))
        return pl.BlockSpec(shape, lambda i: (0, 0))

    kernel = functools.partial(_mlp_kernel, activation=activation)
    return pl.pallas_call(
        kernel,
        out_shape=jax.ShapeDtypeStruct((grid_m * TB, O_pad), out_dtype),
        grid_spec=pltpu.PrefetchScalarGridSpec(
            num_scalar_prefetch=0,
            grid=(grid_m,),
            in_specs=[
                pl.BlockSpec((TB, K_pad), lambda i: (i, 0)),   # X streams
                _resident_spec((K_pad, H_pad)),                # W1 resident
                _resident_spec((1, H_pad)),                    # b1
                _resident_spec((H_pad, O_pad)),                # W2 resident
                _resident_spec((1, O_pad)),                    # b2
            ],
            out_specs=pl.BlockSpec((TB, O_pad), lambda i: (i, 0)),
        ),
        compiler_params=pltpu.CompilerParams(
            dimension_semantics=("parallel",),
            vmem_limit_bytes=vmem_limit,
        ),
        cost_estimate=cost,
    )


def nn_model_forward(x, params, activation=None, *, tb=512, out_dtype=None):
    """Fused forward pass of NNModel using pre-padded params (prepare_params)."""
    global _SINGLE_BUFFER_WEIGHTS_OK

    B, K = x.shape
    assert K == params["K"], "input feature dim mismatch"
    K_pad, H_pad = params["K_pad"], params["H_pad"]
    O, O_pad = params["O"], params["O_pad"]
    cdt = params["compute_dtype"]
    bpe = cdt.itemsize
    out_dtype = jnp.dtype(out_dtype if out_dtype is not None else x.dtype)

    # ---- Batch tile: multiple of 16 (bf16 sublane packing), minimal slack.
    n_tiles = max(1, pl.cdiv(B, tb))
    TB = _round_up(pl.cdiv(B, n_tiles), 16)

    vmem_cap = _vmem_cap_bytes()

    def _vmem_estimate(tb_rows, weight_bufs):
        return (
            2 * tb_rows * K_pad * bpe                     # X tile, double-buffered
            + 2 * tb_rows * O_pad * out_dtype.itemsize    # OUT tile, double-buffered
            + weight_bufs * (K_pad * H_pad + H_pad * O_pad) * bpe   # weights
            + weight_bufs * (H_pad + O_pad) * 4           # biases (f32)
            + tb_rows * H_pad * 4                         # f32 hidden intermediate
            + tb_rows * O_pad * 4                         # f32 second-matmul accum
        )

    # Shrink TB if the working set would blow the per-device VMEM budget.
    while _vmem_estimate(TB, 1) > vmem_cap and TB > 16:
        TB = _round_up(TB // 2, 16)
    # TODO(synk): if (K_pad*H_pad + H_pad*O_pad)*bpe alone exceeds ~3/4 of the
    # budget (large layers, esp. v7x 64 MiB/TC), add K/H reduction grid axes
    # marked "arbitrary" with an f32 VMEM accumulator (pl.when init/finalize)
    # and stream W1/W2 tiles instead of keeping them resident.

    grid_m = pl.cdiv(B, TB)
    B_pad = grid_m * TB

    vmem_limit = int(min(max(_vmem_estimate(TB, 2) + (4 << 20), 32 << 20), vmem_cap))

    flops = 2 * B_pad * (K_pad * H_pad + H_pad * O_pad)
    transcendentals = B_pad * H_pad if activation in ("Sigmoid", "Tanh") else 0
    bytes_accessed = (
        B_pad * K_pad * bpe
        + (K_pad * H_pad + H_pad * O_pad) * bpe
        + (H_pad + O_pad) * 4
        + B_pad * O_pad * out_dtype.itemsize
    )
    cost = pl.CostEstimate(flops=int(flops),
                           transcendentals=int(transcendentals),
                           bytes_accessed=int(bytes_accessed))

    # Only the activations are padded per call (zeros in padded K columns).
    x_p = jnp.zeros((B_pad, K_pad), cdt).at[:B, :K].set(x.astype(cdt))
    operands = (x_p, params["w1"], params["b1"], params["w2"], params["b2"])

    if _SINGLE_BUFFER_WEIGHTS_OK is None:
        try:
            out = _build_call(params, activation, TB, grid_m, out_dtype,
                              vmem_limit, cost, True)(*operands)
            out = jax.block_until_ready(out)
            _SINGLE_BUFFER_WEIGHTS_OK = True
            return out[:B, :O]
        except Exception:
            _SINGLE_BUFFER_WEIGHTS_OK = False

    out = _build_call(params, activation, TB, grid_m, out_dtype, vmem_limit,
                      cost, _SINGLE_BUFFER_WEIGHTS_OK)(*operands)
    return out[:B, :O]


# ---------------------------------------------------------------------------
# Helpers for the self-test
# ---------------------------------------------------------------------------
def init_params(key, input_size, hidden_size, output_size):
    """Deterministic init mimicking torch.nn.Linear default (uniform +-1/sqrt(fan_in))."""
    k1, k2, k3, k4 = jax.random.split(key, 4)
    lim1 = 1.0 / jnp.sqrt(input_size)
    lim2 = 1.0 / jnp.sqrt(hidden_size)
    w1 = jax.random.uniform(k1, (input_size, hidden_size), jnp.float32, -lim1, lim1)
    b1 = jax.random.uniform(k2, (hidden_size,), jnp.float32, -lim1, lim1)
    w2 = jax.random.uniform(k3, (hidden_size, output_size), jnp.float32, -lim2, lim2)
    b2 = jax.random.uniform(k4, (output_size,), jnp.float32, -lim2, lim2)
    return w1, b1, w2, b2


def _reference(x, w1, b1, w2, b2, activation=None, dtype=jnp.float32):
    h = jnp.dot(x.astype(dtype), w1.astype(dtype),
                preferred_element_type=jnp.float32) + b1
    if activation == "Sigmoid":
        h = jax.nn.sigmoid(h)
    elif activation == "Tanh":
        h = jnp.tanh(h)
    else:
        h = jnp.maximum(h, 0.0)
    return jnp.dot(h.astype(dtype), w2.astype(dtype),
                   preferred_element_type=jnp.float32) + b2


if __name__ == "__main__":
    # Small shapes consistent with the module: batch=8, inputSize=32,
    # hiddenSize=64, outputSize=16.
    batch, input_size, hidden_size, output_size = 8, 32, 64, 16

    key = jax.random.PRNGKey(0)
    kx, kp = jax.random.split(key)
    x = jax.random.normal(kx, (batch, input_size), dtype=jnp.float32)
    w1, b1, w2, b2 = init_params(kp, input_size, hidden_size, output_size)

    # Fast path: bf16 MXU operands, f32 accumulation, ReLU (activate=None).
    params_bf16 = prepare_params(w1, b1, w2, b2, compute_dtype=jnp.bfloat16)
    out_bf16 = jax.block_until_ready(nn_model_forward(x, params_bf16, activation=None))
    ref_bf16 = _reference(x, w1, b1, w2, b2, activation=None, dtype=jnp.bfloat16)
    assert out_bf16.shape == (batch, output_size)
    assert out_bf16.dtype == x.dtype
    assert jnp.allclose(out_bf16, ref_bf16, atol=1e-2, rtol=1e-2)

    # Exactness in f32 compute mode, covering the Tanh activation path.
    params_f32 = prepare_params(w1, b1, w2, b2, compute_dtype=jnp.float32)
    out_f32 = jax.block_until_ready(nn_model_forward(x, params_f32, activation="Tanh"))
    ref_f32 = _reference(x, w1, b1, w2, b2, activation="Tanh", dtype=jnp.float32)
    assert jnp.allclose(out_f32, ref_f32, atol=1e-5, rtol=1e-5)

    # Sigmoid path (bf16 compute).
    out_sig = jax.block_until_ready(nn_model_forward(x, params_bf16, activation="Sigmoid"))
    ref_sig = _reference(x, w1, b1, w2, b2, activation="Sigmoid", dtype=jnp.bfloat16)
    assert jnp.allclose(out_sig, ref_sig, atol=1e-2, rtol=1e-2)

    print("KERNEL_OK")
</pallas_src>

<mosaic_0001>
module attributes {stable_mosaic.version = 11 : i64} {
  func.func @_mlp_kernel(%arg0: i32, %arg1: memref<16x128xbf16, #tpu.memory_space<vmem>>, %arg2: memref<128x128xbf16, #tpu.memory_space<vmem>>, %arg3: memref<1x128xf32, #tpu.memory_space<vmem>>, %arg4: memref<128x128xbf16, #tpu.memory_space<vmem>>, %arg5: memref<1x128xf32, #tpu.memory_space<vmem>>, %arg6: memref<16x128xf32, #tpu.memory_space<vmem>>) attributes {dimension_semantics = [#tpu.dimension_semantics<parallel>], iteration_bounds = array<i64: 1>, scalar_prefetch = 0 : i64, scratch_operands = 0 : i64, tpu.core_type = #tpu.core_type<tc>, window_params = [{transform_indices = @transform_0, window_bounds = array<i64: 16, 128>}, {pipeline_mode = #tpu.pipeline_mode<synchronous>, transform_indices = @transform_1, window_bounds = array<i64: 128, 128>}, {pipeline_mode = #tpu.pipeline_mode<synchronous>, transform_indices = @transform_2, window_bounds = array<i64: 1, 128>}, {pipeline_mode = #tpu.pipeline_mode<synchronous>, transform_indices = @transform_3, window_bounds = array<i64: 128, 128>}, {pipeline_mode = #tpu.pipeline_mode<synchronous>, transform_indices = @transform_4, window_bounds = array<i64: 1, 128>}, {transform_indices = @transform_5, window_bounds = array<i64: 16, 128>}]} {
    %c0 = arith.constant 0 : index
    %c0_0 = arith.constant 0 : index
    %0 = vector.load %arg1[%c0, %c0_0] : memref<16x128xbf16, #tpu.memory_space<vmem>>, vector<16x128xbf16>
    %c0_1 = arith.constant 0 : index
    %c0_2 = arith.constant 0 : index
    %1 = vector.load %arg2[%c0_1, %c0_2] : memref<128x128xbf16, #tpu.memory_space<vmem>>, vector<128x128xbf16>
    %cst = arith.constant dense<0.000000e+00> : vector<16x128xf32>
    %2 = tpu.matmul %0, %1, %cst {dimension_numbers = #tpu.dot_dimension_numbers<[1], [0], [0], [1], [0, 0, 1, 1], [], []>} : vector<16x128xbf16>, vector<128x128xbf16>, vector<16x128xf32> -> vector<16x128xf32>
    %c0_3 = arith.constant 0 : index
    %c0_4 = arith.constant 0 : index
    %3 = vector.load %arg3[%c0_3, %c0_4] : memref<1x128xf32, #tpu.memory_space<vmem>>, vector<1x128xf32>
    %4 = vector.broadcast %3 : vector<1x128xf32> to vector<16x128xf32>
    %5 = arith.addf %2, %4 : vector<16x128xf32>
    %cst_5 = arith.constant 0.000000e+00 : f32
    %6 = vector.broadcast %cst_5 : f32 to vector<16x128xf32>
    %7 = arith.maximumf %5, %6 : vector<16x128xf32>
    %8 = arith.truncf %7 : vector<16x128xf32> to vector<16x128xbf16>
    %c0_6 = arith.constant 0 : index
    %c0_7 = arith.constant 0 : index
    %9 = vector.load %arg4[%c0_6, %c0_7] : memref<128x128xbf16, #tpu.memory_space<vmem>>, vector<128x128xbf16>
    %cst_8 = arith.constant dense<0.000000e+00> : vector<16x128xf32>
    %10 = tpu.matmul %8, %9, %cst_8 {dimension_numbers = #tpu.dot_dimension_numbers<[1], [0], [0], [1], [0, 0, 1, 1], [], []>} : vector<16x128xbf16>, vector<128x128xbf16>, vector<16x128xf32> -> vector<16x128xf32>
    %c0_9 = arith.constant 0 : index
    %c0_10 = arith.constant 0 : index
    %11 = vector.load %arg5[%c0_9, %c0_10] : memref<1x128xf32, #tpu.memory_space<vmem>>, vector<1x128xf32>
    %12 = vector.broadcast %11 : vector<1x128xf32> to vector<16x128xf32>
    %13 = arith.addf %10, %12 : vector<16x128xf32>
    %c0_11 = arith.constant 0 : index
    %c0_12 = arith.constant 0 : index
    %14 = vector.load %arg6[%c0_11, %c0_12] : memref<16x128xf32, #tpu.memory_space<vmem>>, vector<16x128xf32>
    tpu.vector_store %arg6[%c0_11, %c0_12], %13 {strides = array<i32>} : memref<16x128xf32, #tpu.memory_space<vmem>>, vector<16x128xf32>,
    return
  }
  func.func @transform_0(%arg0: i32) -> (i32, i32) {
    %c0_i32 = arith.constant 0 : i32
    %c0_i32_0 = arith.constant 0 : i32
    return %arg0, %c0_i32 : i32, i32
  }
  func.func @transform_1(%arg0: i32) -> (i32, i32) {
    %c0_i32 = arith.constant 0 : i32
    %c0_i32_0 = arith.constant 0 : i32
    %c0_i32_1 = arith.constant 0 : i32
    return %c0_i32, %c0_i32_0 : i32, i32
  }
  func.func @transform_2(%arg0: i32) -> (i32, i32) {
    %c0_i32 = arith.constant 0 : i32
    %c0_i32_0 = arith.constant 0 : i32
    %c0_i32_1 = arith.constant 0 : i32
    return %c0_i32, %c0_i32_0 : i32, i32
  }
  func.func @transform_3(%arg0: i32) -> (i32, i32) {
    %c0_i32 = arith.constant 0 : i32
    %c0_i32_0 = arith.constant 0 : i32
    %c0_i32_1 = arith.constant 0 : i32
    return %c0_i32, %c0_i32_0 : i32, i32
  }
  func.func @transform_4(%arg0: i32) -> (i32, i32) {
    %c0_i32 = arith.constant 0 : i32
    %c0_i32_0 = arith.constant 0 : i32
    %c0_i32_1 = arith.constant 0 : i32
    return %c0_i32, %c0_i32_0 : i32, i32
  }
  func.func @transform_5(%arg0: i32) -> (i32, i32) {
    %c0_i32 = arith.constant 0 : i32
    %c0_i32_0 = arith.constant 0 : i32
    return %arg0, %c0_i32 : i32, i32
  }
}

module attributes {stable_mosaic.version = 11 : i64} {
  func.func @_mlp_kernel(%arg0: i32, %arg1: memref<16x128xbf16, #tpu.memory_space<vmem>>, %arg2: memref<128x128xbf16, #tpu.memory_space<vmem>>, %arg3: memref<1x128xf32, #tpu.memory_space<vmem>>, %arg4: memref<128x128xbf16, #tpu.memory_space<vmem>>, %arg5: memref<1x128xf32, #tpu.memory_space<vmem>>, %arg6: memref<16x128xf32, #tpu.memory_space<vmem>>) attributes {dimension_semantics = [#tpu.dimension_semantics<parallel>], iteration_bounds = array<i64: 1>, scalar_prefetch = 0 : i64, scratch_operands = 0 : i64, tpu.core_type = #tpu.core_type<tc>, window_params = [{transform_indices = @transform_0, window_bounds = array<i64: 16, 128>}, {pipeline_mode = #tpu.pipeline_mode<synchronous>, transform_indices = @transform_1, window_bounds = array<i64: 128, 128>}, {pipeline_mode = #tpu.pipeline_mode<synchronous>, transform_indices = @transform_2, window_bounds = array<i64: 1, 128>}, {pipeline_mode = #tpu.pipeline_mode<synchronous>, transform_indices = @transform_3, window_bounds = array<i64: 128, 128>}, {pipeline_mode = #tpu.pipeline_mode<synchronous>, transform_indices = @transform_4, window_bounds = array<i64: 1, 128>}, {transform_indices = @transform_5, window_bounds = array<i64: 16, 128>}]} {
    %c0 = arith.constant 0 : index
    %c0_0 = arith.constant 0 : index
    %0 = vector.load %arg1[%c0, %c0_0] : memref<16x128xbf16, #tpu.memory_space<vmem>>, vector<16x128xbf16>
    %c0_1 = arith.constant 0 : index
    %c0_2 = arith.constant 0 : index
    %1 = vector.load %arg2[%c0_1, %c0_2] : memref<128x128xbf16, #tpu.memory_space<vmem>>, vector<128x128xbf16>
    %cst = arith.constant dense<0.000000e+00> : vector<16x128xf32>
    %2 = tpu.matmul %0, %1, %cst {dimension_numbers = #tpu.dot_dimension_numbers<[1], [0], [0], [1], [0, 0, 1, 1], [], []>} : vector<16x128xbf16>, vector<128x128xbf16>, vector<16x128xf32> -> vector<16x128xf32>
    %c0_3 = arith.constant 0 : index
    %c0_4 = arith.constant 0 : index
    %3 = vector.load %arg3[%c0_3, %c0_4] : memref<1x128xf32, #tpu.memory_space<vmem>>, vector<1x128xf32>
    %4 = vector.broadcast %3 : vector<1x128xf32> to vector<16x128xf32>
    %5 = arith.addf %2, %4 : vector<16x128xf32>
    %cst_5 = arith.constant 0.000000e+00 : f32
    %6 = vector.broadcast %cst_5 : f32 to vector<16x128xf32>
    %7 = arith.maximumf %5, %6 : vector<16x128xf32>
    %8 = arith.truncf %7 : vector<16x128xf32> to vector<16x128xbf16>
    %c0_6 = arith.constant 0 : index
    %c0_7 = arith.constant 0 : index
    %9 = vector.load %arg4[%c0_6, %c0_7] : memref<128x128xbf16, #tpu.memory_space<vmem>>, vector<128x128xbf16>
    %cst_8 = arith.constant dense<0.000000e+00> : vector<16x128xf32>
    %10 = tpu.matmul %8, %9, %cst_8 {dimension_numbers = #tpu.dot_dimension_numbers<[1], [0], [0], [1], [0, 0, 1, 1], [], []>} : vector<16x128xbf16>, vector<128x128xbf16>, vector<16x128xf32> -> vector<16x128xf32>
    %c0_9 = arith.constant 0 : index
    %c0_10 = arith.constant 0 : index
    %11 = vector.load %arg5[%c0_9, %c0_10] : memref<1x128xf32, #tpu.memory_space<vmem>>, vector<1x128xf32>
    %12 = vector.broadcast %11 : vector<1x128xf32> to vector<16x128xf32>
    %13 = arith.addf %10, %12 : vector<16x128xf32>
    %c0_11 = arith.constant 0 : index
    %c0_12 = arith.constant 0 : index
    %14 = vector.load %arg6[%c0_11, %c0_12] : memref<16x128xf32, #tpu.memory_space<vmem>>, vector<16x128xf32>
    tpu.vector_store %arg6[%c0_11, %c0_12], %13 {strides = array<i32>} : memref<16x128xf32, #tpu.memory_space<vmem>>, vector<16x128xf32>,
    return
  }
  func.func @transform_0(%arg0: i32) -> (i32, i32) {
    %c0_i32 = arith.constant 0 : i32
    %c0_i32_0 = arith.constant 0 : i32
    return %arg0, %c0_i32 : i32, i32
  }
  func.func @transform_1(%arg0: i32) -> (i32, i32) {
    %c0_i32 = arith.constant 0 : i32
    %c0_i32_0 = arith.constant 0 : i32
    %c0_i32_1 = arith.constant 0 : i32
    return %c0_i32, %c0_i32_0 : i32, i32
  }
  func.func @transform_2(%arg0: i32) -> (i32, i32) {
    %c0_i32 = arith.constant 0 : i32
    %c0_i32_0 = arith.constant 0 : i32
    %c0_i32_1 = arith.constant 0 : i32
    return %c0_i32, %c0_i32_0 : i32, i32
  }
  func.func @transform_3(%arg0: i32) -> (i32, i32) {
    %c0_i32 = arith.constant 0 : i32
    %c0_i32_0 = arith.constant 0 : i32
    %c0_i32_1 = arith.constant 0 : i32
    return %c0_i32, %c0_i32_0 : i32, i32
  }
  func.func @transform_4(%arg0: i32) -> (i32, i32) {
    %c0_i32 = arith.constant 0 : i32
    %c0_i32_0 = arith.constant 0 : i32
    %c0_i32_1 = arith.constant 0 : i32
    return %c0_i32, %c0_i32_0 : i32, i32
  }
  func.func @transform_5(%arg0: i32) -> (i32, i32) {
    %c0_i32 = arith.constant 0 : i32
    %c0_i32_0 = arith.constant 0 : i32
    return %arg0, %c0_i32 : i32, i32
  }
}

</mosaic_0001>

<llo_original>
// kernel: tpu_custom_call.1
$region0: #{tpu_custom_call.1}
  #allocation0 [shape = 'u32[]', space=smem, size = 0x4, offset = 0x4, fixed_abs, tag = 'smem constant byte address 0x4 - core index']
  #allocation1 [shape = 'u32[72,128]{1,0:T(1,128)}', space=vmem, size = 0x9000, scoped, tag = 'internal scratch']
  %s0 = inlined_call_operand.hbm [shape: bf16[16,128], index: 0, kind: input, shape index: {}]
  %s1 = inlined_call_operand.hbm [shape: bf16[128,128], index: 1, kind: input, shape index: {}]
  %s2 = inlined_call_operand.vmem [shape: f32[1,128], index: 2, kind: input, shape index: {}]
  %s3 = inlined_call_operand.hbm [shape: bf16[128,128], index: 3, kind: input, shape index: {}]
  %s4 = inlined_call_operand.vmem [shape: f32[1,128], index: 4, kind: input, shape index: {}]
  %s5 = inlined_call_operand.hbm [shape: f32[16,128], index: 5, kind: output, shape index: {}]
  %s6 = sld [smem:[#allocation0]]
  $region42: #{tpu_custom_call.1} parent=0
    _
  %s8 = ssub.s32 1, %s6
  %s9 = scalar_select 0, %s8, %s6
  $region1: #{tpu_custom_call.1} parent=0
    #allocation2 [shape = 'u8[4096]{0}', space=vmem, size = 0x1000, scoped, tag = 'input window, operand 0, single buffered']
    #allocation3 [shape = 's32[1]{0}', space=sflag, size = 0x4, scoped, tag = 'scoped memory for tpu_custom_call.1']
    #allocation4 [shape = 's32[1]{0}', space=sflag, size = 0x4, scoped, tag = 'scoped memory for tpu_custom_call.1']
    #allocation5 [shape = 'u8[32768]{0}', space=vmem, size = 0x8000, scoped, tag = 'input window, operand 1, single buffered']
    #allocation6 [shape = 's32[1]{0}', space=sflag, size = 0x4, scoped, tag = 'scoped memory for tpu_custom_call.1']
    #allocation7 [shape = 'u8[32768]{0}', space=vmem, size = 0x8000, scoped, tag = 'input window, operand 3, single buffered']
    #allocation8 [shape = 'u8[8192]{0}', space=vmem, size = 0x2000, scoped, tag = 'output window, operand 0, single buffered']
    %10 = vsyncpa [#allocation3], 0
    %11 = vsyncpa [#allocation6], 0
    %12 = vsyncpa [#allocation4], 0
    // Predicated region
    $region2: #{tpu_custom_call.1} parent=1 // pred_check
      _
    $region3: #{tpu_custom_call.1} parent=1 // pred_check_branch
      %14 = sbr.rel (0) target = $region5
    $region4: #{tpu_custom_call.1} parent=1 // pred_region
      %16 = vsyncadd [#allocation3], 0
      %s17 = sshll.u32 %s0, 4
      %s18 = int_to_ptr.hbm [resolvable:$true] %s17
      %s19 = sshll.u32 [#allocation2], 4
      %s20 = int_to_ptr.vmem [resolvable:$true] %s19
      %25 = dma.hbm_to_vmem [thread:$0]  %s18, 128, %s20, [#allocation3], 64, 64, 4
    $region5: #{tpu_custom_call.1} parent=1 // pred_fallthru
      _
    // Predicated region
    $region6: #{tpu_custom_call.1} parent=1 // pred_check
      _
    $region7: #{tpu_custom_call.1} parent=1 // pred_check_branch
      %27 = sbr.rel (0) target = $region9
    $region8: #{tpu_custom_call.1} parent=1 // pred_region
      %29 = vsyncadd [#allocation6], 0
      %s30 = sshll.u32 %s1, 4
      %s31 = int_to_ptr.hbm [resolvable:$true] %s30
      %s32 = sshll.u32 [#allocation5], 4
      %s33 = int_to_ptr.vmem [resolvable:$true] %s32
      %38 = dma.hbm_to_vmem [thread:$0]  %s31, 1024, %s33, [#allocation6], 64, 64, 4
    $region9: #{tpu_custom_call.1} parent=1 // pred_fallthru
      _
    // Predicated region
    $region10: #{tpu_custom_call.1} parent=1 // pred_check
      _
    $region11: #{tpu_custom_call.1} parent=1 // pred_check_branch
      %40 = sbr.rel (0) target = $region13
    $region12: #{tpu_custom_call.1} parent=1 // pred_region
      _
    $region13: #{tpu_custom_call.1} parent=1 // pred_fallthru
      _
    // Predicated region
    $region14: #{tpu_custom_call.1} parent=1 // pred_check
      _
    $region15: #{tpu_custom_call.1} parent=1 // pred_check_branch
      %42 = sbr.rel (0) target = $region17
    $region16: #{tpu_custom_call.1} parent=1 // pred_region
      %44 = vsyncadd [#allocation6], 0
      %s45 = sshll.u32 %s3, 4
      %s46 = int_to_ptr.hbm [resolvable:$true] %s45
      %s47 = sshll.u32 [#allocation7], 4
      %s48 = int_to_ptr.vmem [resolvable:$true] %s47
      %53 = dma.hbm_to_vmem [thread:$0]  %s46, 1024, %s48, [#allocation6], 64, 64, 4
    $region17: #{tpu_custom_call.1} parent=1 // pred_fallthru
      _
    // Predicated region
    $region18: #{tpu_custom_call.1} parent=1 // pred_check
      _
    $region19: #{tpu_custom_call.1} parent=1 // pred_check_branch
      %55 = sbr.rel (0) target = $region21
    $region20: #{tpu_custom_call.1} parent=1 // pred_region
      _
    $region21: #{tpu_custom_call.1} parent=1 // pred_fallthru
      _
    // Predicated region
    $region22: #{tpu_custom_call.1} parent=1 // pred_check
      _
    $region23: #{tpu_custom_call.1} parent=1 // pred_check_branch
      %57 = sbr.rel (0) target = $region25
    $region24: #{tpu_custom_call.1} parent=1 // pred_region
      %59 = dma.done [#allocation3], 128
    $region25: #{tpu_custom_call.1} parent=1 // pred_fallthru
      _
    // Predicated region
    $region26: #{tpu_custom_call.1} parent=1 // pred_check
      _
    $region27: #{tpu_custom_call.1} parent=1 // pred_check_branch
      %61 = sbr.rel (0) target = $region29
    $region28: #{tpu_custom_call.1} parent=1 // pred_region
      %63 = dma.done [#allocation6], 1024
    $region29: #{tpu_custom_call.1} parent=1 // pred_fallthru
      _
    // Predicated region
    $region30: #{tpu_custom_call.1} parent=1 // pred_check
      _
    $region31: #{tpu_custom_call.1} parent=1 // pred_check_branch
      %65 = sbr.rel (0) target = $region33
    $region32: #{tpu_custom_call.1} parent=1 // pred_region
      %67 = dma.done [#allocation6], 1024
    $region33: #{tpu_custom_call.1} parent=1 // pred_fallthru
      _
    %v68 = vld [vmem:[#allocation2] sm:$0xf]
    %v69 = vld [vmem:[#allocation2 + $0x4] sm:$0xf]
    %v70 = vld [vmem:[#allocation5] sm:$0xf]
    %v71 = vld [vmem:[#allocation5 + $0x4] sm:$0xf]
    %v72 = vld [vmem:[#allocation5 + $0x8] sm:$0xf]
    %v73 = vld [vmem:[#allocation5 + $0xc] sm:$0xf]
    %v74 = vld [vmem:[#allocation5 + $0x10] sm:$0xf]
    %v75 = vld [vmem:[#allocation5 + $0x14] sm:$0xf]
    %v76 = vld [vmem:[#allocation5 + $0x18] sm:$0xf]
    %v77 = vld [vmem:[#allocation5 + $0x1c] sm:$0xf]
    %v78 = vld [vmem:[#allocation5 + $0x20] sm:$0xf]
    %v79 = vld [vmem:[#allocation5 + $0x24] sm:$0xf]
    %v80 = vld [vmem:[#allocation5 + $0x28] sm:$0xf]
    %v81 = vld [vmem:[#allocation5 + $0x2c] sm:$0xf]
    %v82 = vld [vmem:[#allocation5 + $0x30] sm:$0xf]
    %v83 = vld [vmem:[#allocation5 + $0x34] sm:$0xf]
    %v84 = vld [vmem:[#allocation5 + $0x38] sm:$0xf]
    %v85 = vld [vmem:[#allocation5 + $0x3c] sm:$0xf]
    %v86 = vld [vmem:[%s2] sm:$0x1]
    %v88 = vperm.slane %v86, 0
    %v92 = vunpack.c.l.b16 %v68
    %v93 = vunpack.c.l.b16 %v69
    %v94 = vpack.c.b16 %v93, %v92
    %v112 = vunpack.c.l.b16 %v70
    %v113 = vunpack.c.l.b16 %v71
    %v114 = vunpack.c.l.b16 %v72
    %v115 = vunpack.c.l.b16 %v73
    %v116 = vunpack.c.l.b16 %v74
    %v117 = vunpack.c.l.b16 %v75
    %v118 = vunpack.c.l.b16 %v76
    %v119 = vunpack.c.l.b16 %v77
    %v120 = vunpack.c.l.b16 %v78
    %v121 = vunpack.c.l.b16 %v79
    %v122 = vunpack.c.l.b16 %v80
    %v123 = vunpack.c.l.b16 %v81
    %v124 = vunpack.c.l.b16 %v82
    %v125 = vunpack.c.l.b16 %v83
    %v126 = vunpack.c.l.b16 %v84
    %v127 = vunpack.c.l.b16 %v85
    %v128 = vpack.c.b16 %v113, %v112
    %v129 = vpack.c.b16 %v115, %v114
    %v130 = vpack.c.b16 %v117, %v116
    %v131 = vpack.c.b16 %v119, %v118
    %v132 = vpack.c.b16 %v121, %v120
    %v133 = vpack.c.b16 %v123, %v122
    %v134 = vpack.c.b16 %v125, %v124
    %v135 = vpack.c.b16 %v127, %v126
    %144 = vmatpush.bf16.msra.mxu0 %v135
    %145 = vmatpush.bf16.msra.mxu0 %v134
    %146 = vmatpush.bf16.msra.mxu0 %v133
    %147 = vmatpush.bf16.msra.mxu0 %v132
    %148 = vmatpush.bf16.msra.mxu0 %v131
    %149 = vmatpush.bf16.msra.mxu0 %v130
    %150 = vmatpush.bf16.msra.mxu0 %v129
    %151 = vmatpush.bf16.msra.mxu0 %v128
    %152 = vmatmul.bf16.gmra.mxu0 %v94
    %v153 = vpop.f32.mrf.mxu0
    %v154 = vadd.f32 %v88, %v153
    %v155 = vpop.f32.mrf.mxu0
    %v156 = vadd.f32 %v88, %v155
    %157 = vdwg.mxu0
    %v158 = vmax.f32 %v154, 0.0
    %v159 = vmax.f32 %v156, 0.0
    %v160 = vpack.c.bf16 %v159, %v158
    %v161 = vld [vmem:[#allocation7] sm:$0xf]
    %v162 = vld [vmem:[#allocation7 + $0x4] sm:$0xf]
    %v163 = vld [vmem:[#allocation7 + $0x8] sm:$0xf]
    %v164 = vld [vmem:[#allocation7 + $0xc] sm:$0xf]
    %v165 = vld [vmem:[#allocation7 + $0x10] sm:$0xf]
    %v166 = vld [vmem:[#allocation7 + $0x14] sm:$0xf]
    %v167 = vld [vmem:[#allocation7 + $0x18] sm:$0xf]
    %v168 = vld [vmem:[#allocation7 + $0x1c] sm:$0xf]
    %v169 = vld [vmem:[#allocation7 + $0x20] sm:$0xf]
    %v170 = vld [vmem:[#allocation7 + $0x24] sm:$0xf]
    %v171 = vld [vmem:[#allocation7 + $0x28] sm:$0xf]
    %v172 = vld [vmem:[#allocation7 + $0x2c] sm:$0xf]
    %v173 = vld [vmem:[#allocation7 + $0x30] sm:$0xf]
    %v174 = vld [vmem:[#allocation7 + $0x34] sm:$0xf]
    %v175 = vld [vmem:[#allocation7 + $0x38] sm:$0xf]
    %v176 = vld [vmem:[#allocation7 + $0x3c] sm:$0xf]
    %v177 = vld [vmem:[%s4] sm:$0x1]
    %v179 = vperm.slane %v177, 0
    %v197 = vunpack.c.l.b16 %v161
    %v198 = vunpack.c.l.b16 %v162
    %v199 = vunpack.c.l.b16 %v163
    %v200 = vunpack.c.l.b16 %v164
    %v201 = vunpack.c.l.b16 %v165
    %v202 = vunpack.c.l.b16 %v166
    %v203 = vunpack.c.l.b16 %v167
    %v204 = vunpack.c.l.b16 %v168
    %v205 = vunpack.c.l.b16 %v169
    %v206 = vunpack.c.l.b16 %v170
    %v207 = vunpack.c.l.b16 %v171
    %v208 = vunpack.c.l.b16 %v172
    %v209 = vunpack.c.l.b16 %v173
    %v210 = vunpack.c.l.b16 %v174
    %v211 = vunpack.c.l.b16 %v175
    %v212 = vunpack.c.l.b16 %v176
    %v213 = vpack.c.b16 %v198, %v197
    %v214 = vpack.c.b16 %v200, %v199
    %v215 = vpack.c.b16 %v202, %v201
    %v216 = vpack.c.b16 %v204, %v203
    %v217 = vpack.c.b16 %v206, %v205
    %v218 = vpack.c.b16 %v208, %v207
    %v219 = vpack.c.b16 %v210, %v209
    %v220 = vpack.c.b16 %v212, %v211
    %229 = vmatpush.bf16.msra.mxu0 %v220
    %230 = vmatpush.bf16.msra.mxu0 %v219
    %231 = vmatpush.bf16.msra.mxu0 %v218
    %232 = vmatpush.bf16.msra.mxu0 %v217
    %233 = vmatpush.bf16.msra.mxu0 %v216
    %234 = vmatpush.bf16.msra.mxu0 %v215
    %235 = vmatpush.bf16.msra.mxu0 %v214
    %236 = vmatpush.bf16.msra.mxu0 %v213
    %237 = vmatmul.bf16.gmra.mxu0 %v160
    %v238 = vpop.f32.mrf.mxu0
    %v239 = vadd.f32 %v179, %v238
    %v240 = vpop.f32.mrf.mxu0
    %v241 = vadd.f32 %v179, %v240
    %242 = vdwg.mxu0
    %243 = vst [vmem:[#allocation8] sm:$0xff] %v239
    %244 = vst [vmem:[#allocation8 + $0x8] sm:$0xff] %v241
    // Predicated region
    $region34: #{tpu_custom_call.1} parent=1 // pred_check
      _
    $region35: #{tpu_custom_call.1} parent=1 // pred_check_branch
      %246 = sbr.rel (0) target = $region37
    $region36: #{tpu_custom_call.1} parent=1 // pred_region
      %248 = vsyncadd [#allocation4], 0
      %s249 = sshll.u32 [#allocation8], 4
      %s250 = int_to_ptr.vmem [resolvable:$true] %s249
      %s251 = sshll.u32 %s5, 4
      %s252 = int_to_ptr.hbm [resolvable:$true] %s251
      %257 = dma.vmem_to_hbm [thread:$0]  %s250, 256, %s252, [#allocation4], 128, 128, 8
    $region37: #{tpu_custom_call.1} parent=1 // pred_fallthru
      _
    // Predicated region
    $region38: #{tpu_custom_call.1} parent=1 // pred_check
      _
    $region39: #{tpu_custom_call.1} parent=1 // pred_check_branch
      %259 = sbr.rel (0) target = $region41
    $region40: #{tpu_custom_call.1} parent=1 // pred_region
      %261 = dma.done [#allocation4], 256
    $region41: #{tpu_custom_call.1} parent=1 // pred_fallthru
      _
    %262 = vsyncpa [#allocation3], 1
    %263 = vsyncpa [#allocation6], 1
    %264 = vsyncpa [#allocation4], 1

// kernel: tpu_custom_call.1
$region0: #{tpu_custom_call.1}
  #allocation0 [shape = 'u32[]', space=smem, size = 0x4, offset = 0x4, fixed_abs, tag = 'smem constant byte address 0x4 - core index']
  #allocation1 [shape = 'u32[72,128]{1,0:T(1,128)}', space=vmem, size = 0x9000, scoped, tag = 'internal scratch']
  %s0 = inlined_call_operand.hbm [shape: bf16[16,128], index: 0, kind: input, shape index: {}]
  %s1 = inlined_call_operand.hbm [shape: bf16[128,128], index: 1, kind: input, shape index: {}]
  %s2 = inlined_call_operand.vmem [shape: f32[1,128], index: 2, kind: input, shape index: {}]
  %s3 = inlined_call_operand.hbm [shape: bf16[128,128], index: 3, kind: input, shape index: {}]
  %s4 = inlined_call_operand.vmem [shape: f32[1,128], index: 4, kind: input, shape index: {}]
  %s5 = inlined_call_operand.hbm [shape: f32[16,128], index: 5, kind: output, shape index: {}]
  %s6 = sld [smem:[#allocation0]]
  $region42: #{tpu_custom_call.1} parent=0
    _
  %s8 = ssub.s32 1, %s6
  %s9 = scalar_select 0, %s8, %s6
  $region1: #{tpu_custom_call.1} parent=0
    #allocation2 [shape = 'u8[4096]{0}', space=vmem, size = 0x1000, scoped, tag = 'input window, operand 0, single buffered']
    #allocation3 [shape = 's32[1]{0}', space=sflag, size = 0x4, scoped, tag = 'scoped memory for tpu_custom_call.1']
    #allocation4 [shape = 's32[1]{0}', space=sflag, size = 0x4, scoped, tag = 'scoped memory for tpu_custom_call.1']
    #allocation5 [shape = 'u8[32768]{0}', space=vmem, size = 0x8000, scoped, tag = 'input window, operand 1, single buffered']
    #allocation6 [shape = 's32[1]{0}', space=sflag, size = 0x4, scoped, tag = 'scoped memory for tpu_custom_call.1']
    #allocation7 [shape = 'u8[32768]{0}', space=vmem, size = 0x8000, scoped, tag = 'input window, operand 3, single buffered']
    #allocation8 [shape = 'u8[8192]{0}', space=vmem, size = 0x2000, scoped, tag = 'output window, operand 0, single buffered']
    %10 = vsyncpa [#allocation3], 0
    %11 = vsyncpa [#allocation6], 0
    %12 = vsyncpa [#allocation4], 0
    // Predicated region
    $region2: #{tpu_custom_call.1} parent=1 // pred_check
      _
    $region3: #{tpu_custom_call.1} parent=1 // pred_check_branch
      %14 = sbr.rel (0) target = $region5
    $region4: #{tpu_custom_call.1} parent=1 // pred_region
      %16 = vsyncadd [#allocation3], 0
      %s17 = sshll.u32 %s0, 4
      %s18 = int_to_ptr.hbm [resolvable:$true] %s17
      %s19 = sshll.u32 [#allocation2], 4
      %s20 = int_to_ptr.vmem [resolvable:$true] %s19
      %25 = dma.hbm_to_vmem [thread:$0]  %s18, 128, %s20, [#allocation3], 64, 64, 4
    $region5: #{tpu_custom_call.1} parent=1 // pred_fallthru
      _
    // Predicated region
    $region6: #{tpu_custom_call.1} parent=1 // pred_check
      _
    $region7: #{tpu_custom_call.1} parent=1 // pred_check_branch
      %27 = sbr.rel (0) target = $region9
    $region8: #{tpu_custom_call.1} parent=1 // pred_region
      %29 = vsyncadd [#allocation6], 0
      %s30 = sshll.u32 %s1, 4
      %s31 = int_to_ptr.hbm [resolvable:$true] %s30
      %s32 = sshll.u32 [#allocation5], 4
      %s33 = int_to_ptr.vmem [resolvable:$true] %s32
      %38 = dma.hbm_to_vmem [thread:$0]  %s31, 1024, %s33, [#allocation6], 64, 64, 4
    $region9: #{tpu_custom_call.1} parent=1 // pred_fallthru
      _
    // Predicated region
    $region10: #{tpu_custom_call.1} parent=1 // pred_check
      _
    $region11: #{tpu_custom_call.1} parent=1 // pred_check_branch
      %40 = sbr.rel (0) target = $region13
    $region12: #{tpu_custom_call.1} parent=1 // pred_region
      _
    $region13: #{tpu_custom_call.1} parent=1 // pred_fallthru
      _
    // Predicated region
    $region14: #{tpu_custom_call.1} parent=1 // pred_check
      _
    $region15: #{tpu_custom_call.1} parent=1 // pred_check_branch
      %42 = sbr.rel (0) target = $region17
    $region16: #{tpu_custom_call.1} parent=1 // pred_region
      %44 = vsyncadd [#allocation6], 0
      %s45 = sshll.u32 %s3, 4
      %s46 = int_to_ptr.hbm [resolvable:$true] %s45
      %s47 = sshll.u32 [#allocation7], 4
      %s48 = int_to_ptr.vmem [resolvable:$true] %s47
      %53 = dma.hbm_to_vmem [thread:$0]  %s46, 1024, %s48, [#allocation6], 64, 64, 4
    $region17: #{tpu_custom_call.1} parent=1 // pred_fallthru
      _
    // Predicated region
    $region18: #{tpu_custom_call.1} parent=1 // pred_check
      _
    $region19: #{tpu_custom_call.1} parent=1 // pred_check_branch
      %55 = sbr.rel (0) target = $region21
    $region20: #{tpu_custom_call.1} parent=1 // pred_region
      _
    $region21: #{tpu_custom_call.1} parent=1 // pred_fallthru
      _
    // Predicated region
    $region22: #{tpu_custom_call.1} parent=1 // pred_check
      _
    $region23: #{tpu_custom_call.1} parent=1 // pred_check_branch
      %57 = sbr.rel (0) target = $region25
    $region24: #{tpu_custom_call.1} parent=1 // pred_region
      %59 = dma.done [#allocation3], 128
    $region25: #{tpu_custom_call.1} parent=1 // pred_fallthru
      _
    // Predicated region
    $region26: #{tpu_custom_call.1} parent=1 // pred_check
      _
    $region27: #{tpu_custom_call.1} parent=1 // pred_check_branch
      %61 = sbr.rel (0) target = $region29
    $region28: #{tpu_custom_call.1} parent=1 // pred_region
      %63 = dma.done [#allocation6], 1024
    $region29: #{tpu_custom_call.1} parent=1 // pred_fallthru
      _
    // Predicated region
    $region30: #{tpu_custom_call.1} parent=1 // pred_check
      _
    $region31: #{tpu_custom_call.1} parent=1 // pred_check_branch
      %65 = sbr.rel (0) target = $region33
    $region32: #{tpu_custom_call.1} parent=1 // pred_region
      %67 = dma.done [#allocation6], 1024
    $region33: #{tpu_custom_call.1} parent=1 // pred_fallthru
      _
    %v68 = vld [vmem:[#allocation2] sm:$0xf]
    %v69 = vld [vmem:[#allocation2 + $0x4] sm:$0xf]
    %v70 = vld [vmem:[#allocation5] sm:$0xf]
    %v71 = vld [vmem:[#allocation5 + $0x4] sm:$0xf]
    %v72 = vld [vmem:[#allocation5 + $0x8] sm:$0xf]
    %v73 = vld [vmem:[#allocation5 + $0xc] sm:$0xf]
    %v74 = vld [vmem:[#allocation5 + $0x10] sm:$0xf]
    %v75 = vld [vmem:[#allocation5 + $0x14] sm:$0xf]
    %v76 = vld [vmem:[#allocation5 + $0x18] sm:$0xf]
    %v77 = vld [vmem:[#allocation5 + $0x1c] sm:$0xf]
    %v78 = vld [vmem:[#allocation5 + $0x20] sm:$0xf]
    %v79 = vld [vmem:[#allocation5 + $0x24] sm:$0xf]
    %v80 = vld [vmem:[#allocation5 + $0x28] sm:$0xf]
    %v81 = vld [vmem:[#allocation5 + $0x2c] sm:$0xf]
    %v82 = vld [vmem:[#allocation5 + $0x30] sm:$0xf]
    %v83 = vld [vmem:[#allocation5 + $0x34] sm:$0xf]
    %v84 = vld [vmem:[#allocation5 + $0x38] sm:$0xf]
    %v85 = vld [vmem:[#allocation5 + $0x3c] sm:$0xf]
    %v86 = vld [vmem:[%s2] sm:$0x1]
    %v88 = vperm.slane %v86, 0
    %v92 = vunpack.c.l.b16 %v68
    %v93 = vunpack.c.l.b16 %v69
    %v94 = vpack.c.b16 %v93, %v92
    %v112 = vunpack.c.l.b16 %v70
    %v113 = vunpack.c.l.b16 %v71
    %v114 = vunpack.c.l.b16 %v72
    %v115 = vunpack.c.l.b16 %v73
    %v116 = vunpack.c.l.b16 %v74
    %v117 = vunpack.c.l.b16 %v75
    %v118 = vunpack.c.l.b16 %v76
    %v119 = vunpack.c.l.b16 %v77
    %v120 = vunpack.c.l.b16 %v78
    %v121 = vunpack.c.l.b16 %v79
    %v122 = vunpack.c.l.b16 %v80
    %v123 = vunpack.c.l.b16 %v81
    %v124 = vunpack.c.l.b16 %v82
    %v125 = vunpack.c.l.b16 %v83
    %v126 = vunpack.c.l.b16 %v84
    %v127 = vunpack.c.l.b16 %v85
    %v128 = vpack.c.b16 %v113, %v112
    %v129 = vpack.c.b16 %v115, %v114
    %v130 = vpack.c.b16 %v117, %v116
    %v131 = vpack.c.b16 %v119, %v118
    %v132 = vpack.c.b16 %v121, %v120
    %v133 = vpack.c.b16 %v123, %v122
    %v134 = vpack.c.b16 %v125, %v124
    %v135 = vpack.c.b16 %v127, %v126
    %144 = vmatpush.bf16.msra.mxu0 %v135
    %145 = vmatpush.bf16.msra.mxu0 %v134
    %146 = vmatpush.bf16.msra.mxu0 %v133
    %147 = vmatpush.bf16.msra.mxu0 %v132
    %148 = vmatpush.bf16.msra.mxu0 %v131
    %149 = vmatpush.bf16.msra.mxu0 %v130
    %150 = vmatpush.bf16.msra.mxu0 %v129
    %151 = vmatpush.bf16.msra.mxu0 %v128
    %152 = vmatmul.bf16.gmra.mxu0 %v94
    %v153 = vpop.f32.mrf.mxu0
    %v154 = vadd.f32 %v88, %v153
    %v155 = vpop.f32.mrf.mxu0
    %v156 = vadd.f32 %v88, %v155
    %157 = vdwg.mxu0
    %v158 = vmax.f32 %v154, 0.0
    %v159 = vmax.f32 %v156, 0.0
    %v160 = vpack.c.bf16 %v159, %v158
    %v161 = vld [vmem:[#allocation7] sm:$0xf]
    %v162 = vld [vmem:[#allocation7 + $0x4] sm:$0xf]
    %v163 = vld [vmem:[#allocation7 + $0x8] sm:$0xf]
    %v164 = vld [vmem:[#allocation7 + $0xc] sm:$0xf]
    %v165 = vld [vmem:[#allocation7 + $0x10] sm:$0xf]
    %v166 = vld [vmem:[#allocation7 + $0x14] sm:$0xf]
    %v167 = vld [vmem:[#allocation7 + $0x18] sm:$0xf]
    %v168 = vld [vmem:[#allocation7 + $0x1c] sm:$0xf]
    %v169 = vld [vmem:[#allocation7 + $0x20] sm:$0xf]
    %v170 = vld [vmem:[#allocation7 + $0x24] sm:$0xf]
    %v171 = vld [vmem:[#allocation7 + $0x28] sm:$0xf]
    %v172 = vld [vmem:[#allocation7 + $0x2c] sm:$0xf]
    %v173 = vld [vmem:[#allocation7 + $0x30] sm:$0xf]
    %v174 = vld [vmem:[#allocation7 + $0x34] sm:$0xf]
    %v175 = vld [vmem:[#allocation7 + $0x38] sm:$0xf]
    %v176 = vld [vmem:[#allocation7 + $0x3c] sm:$0xf]
    %v177 = vld [vmem:[%s4] sm:$0x1]
    %v179 = vperm.slane %v177, 0
    %v197 = vunpack.c.l.b16 %v161
    %v198 = vunpack.c.l.b16 %v162
    %v199 = vunpack.c.l.b16 %v163
    %v200 = vunpack.c.l.b16 %v164
    %v201 = vunpack.c.l.b16 %v165
    %v202 = vunpack.c.l.b16 %v166
    %v203 = vunpack.c.l.b16 %v167
    %v204 = vunpack.c.l.b16 %v168
    %v205 = vunpack.c.l.b16 %v169
    %v206 = vunpack.c.l.b16 %v170
    %v207 = vunpack.c.l.b16 %v171
    %v208 = vunpack.c.l.b16 %v172
    %v209 = vunpack.c.l.b16 %v173
    %v210 = vunpack.c.l.b16 %v174
    %v211 = vunpack.c.l.b16 %v175
    %v212 = vunpack.c.l.b16 %v176
    %v213 = vpack.c.b16 %v198, %v197
    %v214 = vpack.c.b16 %v200, %v199
    %v215 = vpack.c.b16 %v202, %v201
    %v216 = vpack.c.b16 %v204, %v203
    %v217 = vpack.c.b16 %v206, %v205
    %v218 = vpack.c.b16 %v208, %v207
    %v219 = vpack.c.b16 %v210, %v209
    %v220 = vpack.c.b16 %v212, %v211
    %229 = vmatpush.bf16.msra.mxu0 %v220
    %230 = vmatpush.bf16.msra.mxu0 %v219
    %231 = vmatpush.bf16.msra.mxu0 %v218
    %232 = vmatpush.bf16.msra.mxu0 %v217
    %233 = vmatpush.bf16.msra.mxu0 %v216
    %234 = vmatpush.bf16.msra.mxu0 %v215
    %235 = vmatpush.bf16.msra.mxu0 %v214
    %236 = vmatpush.bf16.msra.mxu0 %v213
    %237 = vmatmul.bf16.gmra.mxu0 %v160
    %v238 = vpop.f32.mrf.mxu0
    %v239 = vadd.f32 %v179, %v238
    %v240 = vpop.f32.mrf.mxu0
    %v241 = vadd.f32 %v179, %v240
    %242 = vdwg.mxu0
    %243 = vst [vmem:[#allocation8] sm:$0xff] %v239
    %244 = vst [vmem:[#allocation8 + $0x8] sm:$0xff] %v241
    // Predicated region
    $region34: #{tpu_custom_call.1} parent=1 // pred_check
      _
    $region35: #{tpu_custom_call.1} parent=1 // pred_check_branch
      %246 = sbr.rel (0) target = $region37
    $region36: #{tpu_custom_call.1} parent=1 // pred_region
      %248 = vsyncadd [#allocation4], 0
      %s249 = sshll.u32 [#allocation8], 4
      %s250 = int_to_ptr.vmem [resolvable:$true] %s249
      %s251 = sshll.u32 %s5, 4
      %s252 = int_to_ptr.hbm [resolvable:$true] %s251
      %257 = dma.vmem_to_hbm [thread:$0]  %s250, 256, %s252, [#allocation4], 128, 128, 8
    $region37: #{tpu_custom_call.1} parent=1 // pred_fallthru
      _
    // Predicated region
    $region38: #{tpu_custom_call.1} parent=1 // pred_check
      _
    $region39: #{tpu_custom_call.1} parent=1 // pred_check_branch
      %259 = sbr.rel (0) target = $region41
    $region40: #{tpu_custom_call.1} parent=1 // pred_region
      %261 = dma.done [#allocation4], 256
    $region41: #{tpu_custom_call.1} parent=1 // pred_fallthru
      _
    %262 = vsyncpa [#allocation3], 1
    %263 = vsyncpa [#allocation6], 1
    %264 = vsyncpa [#allocation4], 1

</llo_original>
